<compile_context>
chip_gen: v7x
topology: tpu7x:2x2x1
jax: 0.10.0
libtpu: 0.0.40
codegen_flags: <defaults>
</compile_context>

<pallas_src>
import functools

import jax
import jax.numpy as jnp
from jax.experimental import pallas as pl
from jax.experimental.pallas import tpu as pltpu


# ---------------------------------------------------------------------------
# Generation-aware budgets & tiling helpers
# ---------------------------------------------------------------------------
_MIN_VMEM = 32 << 20


def _tpu_defaults():
    """Tile / VMEM budgets keyed on the TPU generation (conservative fallback)."""
    kind = ""
    try:
        kind = jax.devices()[0].device_kind.lower()
    except Exception:
        pass
    if "7" in kind:
        # v7x: 64 MiB physical VMEM per TensorCore -> stay well under it.
        return {"max_tile_bytes": 8 << 20, "vmem_cap": 48 << 20,
                "fused_limit": 8 << 20}
    if any(g in kind for g in ("v4", "v5", "v6")):
        # v4/v5e/v5p/v6e: 128 MiB physical VMEM -> bigger tiles amortize the
        # ~0.35us per-grid-step overhead further.
        return {"max_tile_bytes": 16 << 20, "vmem_cap": 96 << 20,
                "fused_limit": 16 << 20}
    # Unknown device: use the conservative (v7x) budgets.
    return {"max_tile_bytes": 8 << 20, "vmem_cap": 48 << 20,
            "fused_limit": 8 << 20}


def _sublane_pad(c, itemsize):
    """Second-minor-dim padding granularity (8 rows f32 / 16 bf16 / 32 int8)."""
    sub = 8 * max(1, 4 // max(int(itemsize), 1))
    return (c + sub - 1) // sub * sub


def _per_elem_bytes(itemsize):
    # Worst-case VMEM bytes per tile element: double-buffered in/out tiles in
    # the input dtype plus a few f32 temporaries materialized in the kernel.
    itemsize = max(int(itemsize), 1)
    return max(2 * itemsize + 12, 4 * itemsize + 8)


def _vmem_limit(tile_elems, itemsize, cap):
    need = int(tile_elems) * _per_elem_bytes(itemsize)
    return int(min(cap, max(_MIN_VMEM, need)))


def _lane_tile(hw, budget_elems, min_rows):
    """Largest 128-multiple divisor of hw whose (min_rows x lane) tile fits."""
    if hw % 128 != 0:
        # TODO(synk): masked 128-dense lane tiling for hw not a multiple of
        # 128 (common CNN sizes 49/196/784/3136); full-extent fallback for now.
        return hw
    lt = 128
    for cand in (8192, 4096, 2048, 1024, 512, 256):
        if hw % cand == 0 and min_rows * cand <= budget_elems:
            lt = cand
            break
    return lt


def _choose_tiles_3d(n, c, hw, itemsize, budget_elems):
    """(batch-tile, lane-tile, padded tile elems) for the (N, C, HW) stats slab."""
    c_pad = _sublane_pad(c, itemsize)
    lt = _lane_tile(hw, budget_elems, c_pad)
    tn = max(1, budget_elems // (c_pad * lt))
    tn = min(tn, n)
    while n % tn != 0:
        tn -= 1
    return tn, lt, tn * c_pad * lt


def _choose_tiles_2d(nr, hw, budget_elems):
    """(row-tile, lane-tile, tile elems) for the (N*C, HW) apply slab."""
    lt = _lane_tile(hw, budget_elems, 8)
    if nr >= 8 and nr % 8 == 0:
        tr = max(8, (budget_elems // lt) // 8 * 8)
        tr = min(tr, nr)
        while nr % tr != 0:
            tr -= 8
    else:
        tr = nr          # full-extent row block (legal when nr not 8-aligned)
    return tr, lt, tr * lt


# ---------------------------------------------------------------------------
# Kernels
# ---------------------------------------------------------------------------
def _bn_fused_kernel(x_ref, w_ref, b_ref, o_ref, mean_ref, var_ref, *,
                     inv_count, eps):
    """Single-pass BN for VMEM-resident activations: stats + normalize."""
    x = x_ref[...].astype(jnp.float32)                       # (N, C, HW)
    # VPU reduce over batch first, XLU lane reduce last.
    s_cl = jnp.sum(x, axis=0)                                # (C, HW)
    mean = jnp.sum(s_cl, axis=1, keepdims=True) * inv_count  # (C, 1)
    d = x - mean[None]
    m2_cl = jnp.sum(d * d, axis=0)                           # (C, HW)
    var = jnp.sum(m2_cl, axis=1, keepdims=True) * inv_count  # (C, 1) biased
    inv = jax.lax.rsqrt(var + eps)
    scale = w_ref[...] * inv                                 # (C, 1)
    shift = b_ref[...] - mean * scale
    o_ref[...] = (x * scale[None] + shift[None]).astype(o_ref.dtype)
    mean_ref[...] = mean
    var_ref[...] = var


def _bn_stats_kernel(x_ref, psum_ref, pm2_ref, s_ref, m2_ref, *, tile_count):
    """Per-channel partial (sum, M2) for one N-tile row of the (N, C, HW) slab.

    Grid = (N-tiles ["parallel"], HW-tiles ["arbitrary"]).  HW tiles of a row
    are folded with Chan's stable combine in scratch; the row partial is
    written once on the last HW step (resident-output pattern along HW only,
    so the N axis is safe to megacore-split).
    """
    j = pl.program_id(1)
    x = x_ref[...].astype(jnp.float32)                       # (TN, C, L)
    # VPU reduce over the batch-tile axis first, XLU lane reduce last.
    s_cl = jnp.sum(x, axis=0)                                # (C, L)
    tile_sum = jnp.sum(s_cl, axis=1, keepdims=True)          # (C, 1)
    tile_mean = tile_sum * (1.0 / tile_count)
    d = x - tile_mean[None]                                  # (TN, C, L)
    d2_cl = jnp.sum(d * d, axis=0)                           # (C, L)
    tile_m2 = jnp.sum(d2_cl, axis=1, keepdims=True)          # (C, 1)

    @pl.when(j == 0)
    def _():
        s_ref[...] = tile_sum
        m2_ref[...] = tile_m2

    @pl.when(j > 0)
    def _():
        # Chan's parallel mean/variance combine (counts carried in f32: exact
        # to ~2^24 elements per channel per row tile, plenty for BN).
        n_prev = j.astype(jnp.float32) * tile_count
        n_new = n_prev + tile_count
        mean_prev = s_ref[...] * (1.0 / n_prev)
        delta = tile_mean - mean_prev
        m2_ref[...] = (m2_ref[...] + tile_m2
                       + delta * delta * (n_prev * tile_count / n_new))
        s_ref[...] = s_ref[...] + tile_sum

    @pl.when(j == pl.num_programs(1) - 1)
    def _():
        psum_ref[0] = s_ref[...]
        pm2_ref[0] = m2_ref[...]


def _bn_apply_kernel(x_ref, scale_ref, shift_ref, o_ref):
    """out = x * scale + shift  (per-row scale/shift, one FMA per element)."""
    # f32 compute keeps v5e (no bf16 VPU) and precision safe; the pass is
    # HBM-bound so the upcast is hidden under the DMA.
    x = x_ref[...].astype(jnp.float32)
    o_ref[...] = (x * scale_ref[...] + shift_ref[...]).astype(o_ref.dtype)


# ---------------------------------------------------------------------------
# pallas_call wrappers
# ---------------------------------------------------------------------------
def _bn_fused(x3d, weight, bias, eps, vmem_cap):
    n, c, hw = x3d.shape
    kernel = functools.partial(_bn_fused_kernel,
                               inv_count=1.0 / float(n * hw), eps=float(eps))
    out3d, mean, var = pl.pallas_call(
        kernel,
        out_shape=(jax.ShapeDtypeStruct((n, c, hw), x3d.dtype),
                   jax.ShapeDtypeStruct((c, 1), jnp.float32),
                   jax.ShapeDtypeStruct((c, 1), jnp.float32)),
        grid=(1,),
        in_specs=[pl.BlockSpec((n, c, hw), lambda i: (0, 0, 0)),
                  pl.BlockSpec((c, 1), lambda i: (0, 0)),
                  pl.BlockSpec((c, 1), lambda i: (0, 0))],
        out_specs=(pl.BlockSpec((n, c, hw), lambda i: (0, 0, 0)),
                   pl.BlockSpec((c, 1), lambda i: (0, 0)),
                   pl.BlockSpec((c, 1), lambda i: (0, 0))),
        compiler_params=pltpu.CompilerParams(vmem_limit_bytes=int(vmem_cap)),
    )(x3d, weight.reshape(c, 1), bias.reshape(c, 1))
    return out3d, mean[:, 0], var[:, 0]


def _bn_batch_stats(x3d, tn, lt, vmem_limit):
    """Per-channel mean / biased variance via per-row-tile partial outputs."""
    n, c, hw = x3d.shape
    g_n, g_hw = n // tn, hw // lt
    kernel = functools.partial(_bn_stats_kernel, tile_count=float(tn * lt))
    psum, pm2 = pl.pallas_call(
        kernel,
        out_shape=(jax.ShapeDtypeStruct((g_n, c, 1), jnp.float32),
                   jax.ShapeDtypeStruct((g_n, c, 1), jnp.float32)),
        grid_spec=pltpu.PrefetchScalarGridSpec(
            num_scalar_prefetch=0,
            grid=(g_n, g_hw),
            in_specs=[pl.BlockSpec((tn, c, lt), lambda i, j: (i, 0, j))],
            out_specs=[pl.BlockSpec((1, c, 1), lambda i, j: (i, 0, 0)),
                       pl.BlockSpec((1, c, 1), lambda i, j: (i, 0, 0))],
            scratch_shapes=[pltpu.VMEM((c, 1), jnp.float32),
                            pltpu.VMEM((c, 1), jnp.float32)]),
        compiler_params=pltpu.CompilerParams(
            dimension_semantics=("parallel", "arbitrary"),
            vmem_limit_bytes=vmem_limit),
    )(x3d)
    # Tiny (gridN x C) cross-row-tile combine in plain JAX:
    #   total M2 = sum_i M2_i + sum_i n_i * (mean_i - mean)^2
    row_count = float(tn * hw)
    total = float(n * hw)
    sums = psum[:, :, 0]                                     # (gN, C)
    m2s = pm2[:, :, 0]
    mean = jnp.sum(sums, axis=0) * (1.0 / total)             # (C,)
    mean_i = sums * (1.0 / row_count)
    dev = mean_i - mean[None, :]
    var = (jnp.sum(m2s, axis=0)
           + row_count * jnp.sum(dev * dev, axis=0)) * (1.0 / total)
    return mean, var                                          # biased variance


def _bn_apply(x2d, scale_rows, shift_rows, tr, lt, vmem_limit):
    nr, hw = x2d.shape
    grid = (nr // tr, hw // lt)
    return pl.pallas_call(
        _bn_apply_kernel,
        out_shape=jax.ShapeDtypeStruct((nr, hw), x2d.dtype),
        grid_spec=pltpu.PrefetchScalarGridSpec(
            num_scalar_prefetch=0,
            grid=grid,
            in_specs=[pl.BlockSpec((tr, lt), lambda i, j: (i, j)),
                      pl.BlockSpec((tr, 1), lambda i, j: (i, 0)),
                      pl.BlockSpec((tr, 1), lambda i, j: (i, 0))],
            out_specs=pl.BlockSpec((tr, lt), lambda i, j: (i, j))),
        compiler_params=pltpu.CompilerParams(
            dimension_semantics=("parallel", "parallel"),
            vmem_limit_bytes=vmem_limit),
    )(x2d, scale_rows, shift_rows)


def _apply_rows(x2d, scale_c, shift_c, n, c, itemsize, budget_elems, vmem_cap):
    nr, hw = x2d.shape
    scale_rows = jnp.broadcast_to(scale_c[None, :], (n, c)).reshape(nr, 1)
    shift_rows = jnp.broadcast_to(shift_c[None, :], (n, c)).reshape(nr, 1)
    tr, lt, tile_elems = _choose_tiles_2d(nr, hw, budget_elems)
    return _bn_apply(x2d, scale_rows, shift_rows, tr, lt,
                     _vmem_limit(tile_elems, itemsize, vmem_cap))


# ---------------------------------------------------------------------------
# Functional API
# ---------------------------------------------------------------------------
def batch_norm_2d_train(x_nchw, weight, bias, eps=1e-5, *,
                        max_tile_bytes=None, fused_bytes_limit=None):
    """Training-mode BatchNorm2d on NCHW via Pallas TPU kernels.

    Returns (out_nchw, batch_mean[C], batch_var_biased[C]).
    """
    cfg = _tpu_defaults()
    if max_tile_bytes is None:
        max_tile_bytes = cfg["max_tile_bytes"]
    if fused_bytes_limit is None:
        fused_bytes_limit = cfg["fused_limit"]
    vmem_cap = cfg["vmem_cap"]

    n, c, h, w = x_nchw.shape
    hw = h * w
    itemsize = int(jnp.dtype(x_nchw.dtype).itemsize)
    c_pad = _sublane_pad(c, itemsize)

    weight = weight.astype(jnp.float32)
    bias = bias.astype(jnp.float32)

    # Fused single-pass path: 1 read + 1 write of x when it fits in VMEM
    # (accounting for sublane padding of small C).
    if n * c_pad * hw * 4 <= fused_bytes_limit:
        x3d = x_nchw.reshape(n, c, hw)                       # free view
        out3d, mean, var = _bn_fused(x3d, weight, bias, eps, vmem_cap)
        return out3d.reshape(n, c, h, w), mean, var

    per_elem = _per_elem_bytes(itemsize)
    budget_elems = max(1024, min(max_tile_bytes // itemsize,
                                 vmem_cap // per_elem))

    # Pass 1: per-channel batch statistics on the (N, C, HW) view.
    x3d = x_nchw.reshape(n, c, hw)
    tn, lt, tile_elems = _choose_tiles_3d(n, c, hw, itemsize, budget_elems)
    mean, var = _bn_batch_stats(x3d, tn, lt,
                                _vmem_limit(tile_elems, itemsize, vmem_cap))

    # Tiny C-element epilogue (kept in the wrapper because the partial-output
    # stats formulation finishes the cross-tile combine here).
    inv = jax.lax.rsqrt(var + eps)
    scale = weight * inv                                     # (C,)
    shift = bias - mean * scale                              # (C,)

    # Pass 2: out = x * scale + shift on the (N*C, HW) view (lane-dense, no
    # sublane padding for small C).
    out2d = _apply_rows(x_nchw.reshape(n * c, hw), scale, shift, n, c,
                        itemsize, budget_elems, vmem_cap)
    return out2d.reshape(n, c, h, w), mean, var


def batch_norm_2d_eval(x_nchw, weight, bias, running_mean, running_var,
                       eps=1e-5, *, max_tile_bytes=None):
    """Eval-mode BatchNorm2d (normalize with running stats) via Pallas."""
    cfg = _tpu_defaults()
    if max_tile_bytes is None:
        max_tile_bytes = cfg["max_tile_bytes"]
    vmem_cap = cfg["vmem_cap"]
    n, c, h, w = x_nchw.shape
    hw = h * w
    itemsize = int(jnp.dtype(x_nchw.dtype).itemsize)
    per_elem = _per_elem_bytes(itemsize)
    budget_elems = max(1024, min(max_tile_bytes // itemsize,
                                 vmem_cap // per_elem))
    inv = jax.lax.rsqrt(running_var.astype(jnp.float32) + eps)
    scale = weight.astype(jnp.float32) * inv
    shift = bias.astype(jnp.float32) - running_mean.astype(jnp.float32) * scale
    out2d = _apply_rows(x_nchw.reshape(n * c, hw), scale, shift, n, c,
                        itemsize, budget_elems, vmem_cap)
    return out2d.reshape(n, c, h, w)


# ---------------------------------------------------------------------------
# Module port
# ---------------------------------------------------------------------------
class CondDynamicBatchNorm2dPallas:
    """JAX/Pallas port of CondDynamicBatchNorm2d (forward only)."""

    def __init__(self, num_features, eps=1e-5, momentum=0.1, affine=True,
                 track_running_stats=True, cond_tracking=False, num_archs=None):
        self.num_features = num_features
        self.eps = eps
        self.momentum = momentum
        self.affine = affine
        self.track_running_stats = track_running_stats
        self.cond_tracking = cond_tracking
        self.num_archs = num_archs
        self.temp_not_track = False
        self.training = True  # PyTorch modules default to training mode
        self.active_arch = None
        if cond_tracking:
            assert num_archs

        # Deterministic init mirroring reset_parameters():
        if self.affine:
            self.weight = jnp.ones((num_features,), jnp.float32)
            self.bias = jnp.zeros((num_features,), jnp.float32)
        else:
            self.weight = None
            self.bias = None
        if self.track_running_stats:
            if self.cond_tracking:
                self.running_mean = jnp.zeros((num_archs, num_features), jnp.float32)
                self.running_var = jnp.ones((num_archs, num_features), jnp.float32)
                self.num_batches_tracked = jnp.zeros((num_archs,), jnp.int32)
            else:
                self.running_mean = jnp.zeros((num_features,), jnp.float32)
                self.running_var = jnp.ones((num_features,), jnp.float32)
                self.num_batches_tracked = jnp.zeros((), jnp.int32)
        else:
            self.running_mean = None
            self.running_var = None
            self.num_batches_tracked = None

    def __call__(self, x_nchw):
        if self.cond_tracking:
            assert self.active_arch is not None
        n, feature_dim, h, w = x_nchw.shape

        weight = (self.weight[:feature_dim] if self.affine
                  else jnp.ones((feature_dim,), jnp.float32))
        bias = (self.bias[:feature_dim] if self.affine
                else jnp.zeros((feature_dim,), jnp.float32))

        track = self.track_running_stats and (not self.temp_not_track)
        use_batch_stats = self.training or (not track)

        if use_batch_stats:
            out, batch_mean, batch_var = batch_norm_2d_train(
                x_nchw, weight, bias, eps=self.eps)
            # Running-stat bookkeeping (plain-JAX glue on C-element buffers).
            if self.training and self.track_running_stats:
                if self.cond_tracking:
                    a = self.active_arch
                    self.num_batches_tracked = self.num_batches_tracked.at[a].add(1)
                else:
                    self.num_batches_tracked = self.num_batches_tracked + 1
                if track:
                    if self.momentum is None:
                        if self.cond_tracking:
                            eaf = 1.0 / float(self.num_batches_tracked[self.active_arch])
                        else:
                            eaf = 1.0 / float(self.num_batches_tracked)
                    else:
                        eaf = self.momentum
                    m = n * h * w
                    unbiased_var = batch_var * (m / max(m - 1, 1))
                    if self.cond_tracking:
                        a = self.active_arch
                        self.running_mean = self.running_mean.at[a, :feature_dim].set(
                            (1.0 - eaf) * self.running_mean[a, :feature_dim]
                            + eaf * batch_mean)
                        self.running_var = self.running_var.at[a, :feature_dim].set(
                            (1.0 - eaf) * self.running_var[a, :feature_dim]
                            + eaf * unbiased_var)
                    else:
                        self.running_mean = self.running_mean.at[:feature_dim].set(
                            (1.0 - eaf) * self.running_mean[:feature_dim]
                            + eaf * batch_mean)
                        self.running_var = self.running_var.at[:feature_dim].set(
                            (1.0 - eaf) * self.running_var[:feature_dim]
                            + eaf * unbiased_var)
            return out
        else:
            # Eval path: normalize with running stats via the same apply kernel.
            if self.cond_tracking:
                rm = self.running_mean[self.active_arch, :feature_dim]
                rv = self.running_var[self.active_arch, :feature_dim]
            else:
                rm = self.running_mean[:feature_dim]
                rv = self.running_var[:feature_dim]
            return batch_norm_2d_eval(x_nchw, weight, bias, rm, rv, eps=self.eps)


if __name__ == "__main__":
    key = jax.random.PRNGKey(0)

    # ------- module-level check (exercises the fused single-pass path) ------
    N, C, H, W = 2, 4, 16, 16
    x = jax.random.normal(key, (N, C, H, W), dtype=jnp.float32) * 2.0 + 0.5

    bn = CondDynamicBatchNorm2dPallas(num_features=C, cond_tracking=True,
                                      num_archs=3)
    bn.active_arch = 1
    out = jax.block_until_ready(bn(x))

    mean_ref = jnp.mean(x, axis=(0, 2, 3), keepdims=True)
    var_ref = jnp.mean((x - mean_ref) ** 2, axis=(0, 2, 3), keepdims=True)
    ref = (x - mean_ref) / jnp.sqrt(var_ref + bn.eps)   # weight=1, bias=0
    assert out.shape == x.shape and out.dtype == x.dtype
    assert jnp.max(jnp.abs(out - ref)) < 2e-4

    # Running-stat EMA bookkeeping (momentum=0.1, unbiased var).
    m = N * H * W
    rm_ref = 0.1 * mean_ref.reshape(-1)
    rv_ref = 0.9 * 1.0 + 0.1 * var_ref.reshape(-1) * (m / (m - 1))
    assert jnp.max(jnp.abs(bn.running_mean[1] - rm_ref)) < 1e-4
    assert jnp.max(jnp.abs(bn.running_var[1] - rv_ref)) < 1e-4
    assert int(bn.num_batches_tracked[1]) == 1

    # Eval-mode path (running-stat normalization through the apply kernel).
    bn.training = False
    out_eval = jax.block_until_ready(bn(x))
    rm = bn.running_mean[1].reshape(1, C, 1, 1)
    rv = bn.running_var[1].reshape(1, C, 1, 1)
    ref_eval = (x - rm) / jnp.sqrt(rv + bn.eps)
    assert jnp.max(jnp.abs(out_eval - ref_eval)) < 2e-4

    # ------- multi-tile streaming path (partial-output stats combine over N
    # tiles, Chan combine over HW tiles, multi-step 2-D apply) ---------------
    def check(shape, max_tile_bytes):
        k = jax.random.PRNGKey(1)
        xx = jax.random.normal(k, shape, dtype=jnp.float32) * 3.0 - 1.0
        cc = shape[1]
        wgt = jnp.linspace(0.5, 1.5, cc, dtype=jnp.float32)
        bb = jnp.linspace(-0.2, 0.2, cc, dtype=jnp.float32)
        o, _, _ = batch_norm_2d_train(xx, wgt, bb, eps=1e-5,
                                      max_tile_bytes=max_tile_bytes,
                                      fused_bytes_limit=0)
        mr = jnp.mean(xx, axis=(0, 2, 3), keepdims=True)
        vr = jnp.mean((xx - mr) ** 2, axis=(0, 2, 3), keepdims=True)
        r = ((xx - mr) / jnp.sqrt(vr + 1e-5)
             * wgt.reshape(1, cc, 1, 1) + bb.reshape(1, cc, 1, 1))
        o = jax.block_until_ready(o)
        assert jnp.max(jnp.abs(o - r)) < 2e-4

    check((4, 8, 16, 16), max_tile_bytes=8 * 1024)    # 4 row-tile partials
    check((2, 4, 64, 64), max_tile_bytes=64 * 1024)   # 2x2 grid: Chan + partials

    print("KERNEL_OK")
</pallas_src>

<mosaic_0001>
module attributes {stable_mosaic.version = 11 : i64} {
  func.func @_bn_fused_kernel(%arg0: i32, %arg1: memref<2x4x256xf32, #tpu.memory_space<vmem>>, %arg2: memref<4x1xf32, #tpu.memory_space<vmem>>, %arg3: memref<4x1xf32, #tpu.memory_space<vmem>>, %arg4: memref<2x4x256xf32, #tpu.memory_space<vmem>>, %arg5: memref<4x1xf32, #tpu.memory_space<vmem>>, %arg6: memref<4x1xf32, #tpu.memory_space<vmem>>) attributes {dimension_semantics = [#tpu.dimension_semantics<arbitrary>], iteration_bounds = array<i64: 1>, scalar_prefetch = 0 : i64, scratch_operands = 0 : i64, tpu.core_type = #tpu.core_type<tc>, window_params = [{pipeline_mode = #tpu.pipeline_mode<synchronous>, transform_indices = @transform_0, window_bounds = array<i64: 2, 4, 256>}, {pipeline_mode = #tpu.pipeline_mode<synchronous>, transform_indices = @transform_1, window_bounds = array<i64: 4, 1>}, {pipeline_mode = #tpu.pipeline_mode<synchronous>, transform_indices = @transform_2, window_bounds = array<i64: 4, 1>}, {pipeline_mode = #tpu.pipeline_mode<synchronous>, transform_indices = @transform_3, window_bounds = array<i64: 2, 4, 256>}, {pipeline_mode = #tpu.pipeline_mode<synchronous>, transform_indices = @transform_4, window_bounds = array<i64: 4, 1>}, {pipeline_mode = #tpu.pipeline_mode<synchronous>, transform_indices = @transform_5, window_bounds = array<i64: 4, 1>}]} {
    %c0 = arith.constant 0 : index
    %c0_0 = arith.constant 0 : index
    %c0_1 = arith.constant 0 : index
    %0 = vector.load %arg1[%c0, %c0_0, %c0_1] : memref<2x4x256xf32, #tpu.memory_space<vmem>>, vector<2x4x256xf32>
    %cst = arith.constant dense<0.000000e+00> : vector<4x256xf32>
    %1 = vector.multi_reduction <add>, %0, %cst [0] : vector<2x4x256xf32> to vector<4x256xf32>
    %cst_2 = arith.constant dense<0.000000e+00> : vector<4xf32>
    %2 = vector.multi_reduction <add>, %1, %cst_2 [1] : vector<4x256xf32> to vector<4xf32>
    %3 = vector.shape_cast %2 : vector<4xf32> to vector<4x1xf32>
    %cst_3 = arith.constant 0.001953125 : f32
    %4 = vector.broadcast %cst_3 : f32 to vector<4x1xf32>
    %5 = arith.mulf %3, %4 : vector<4x1xf32>
    %6 = vector.shape_cast %5 : vector<4x1xf32> to vector<1x4x1xf32>
    %7 = vector.broadcast %6 : vector<1x4x1xf32> to vector<2x4x256xf32>
    %8 = arith.subf %0, %7 : vector<2x4x256xf32>
    %9 = arith.mulf %8, %8 : vector<2x4x256xf32>
    %cst_4 = arith.constant dense<0.000000e+00> : vector<4x256xf32>
    %10 = vector.multi_reduction <add>, %9, %cst_4 [0] : vector<2x4x256xf32> to vector<4x256xf32>
    %cst_5 = arith.constant dense<0.000000e+00> : vector<4xf32>
    %11 = vector.multi_reduction <add>, %10, %cst_5 [1] : vector<4x256xf32> to vector<4xf32>
    %12 = vector.shape_cast %11 : vector<4xf32> to vector<4x1xf32>
    %cst_6 = arith.constant 0.001953125 : f32
    %13 = vector.broadcast %cst_6 : f32 to vector<4x1xf32>
    %14 = arith.mulf %12, %13 : vector<4x1xf32>
    %cst_7 = arith.constant 9.99999974E-6 : f32
    %15 = vector.broadcast %cst_7 : f32 to vector<4x1xf32>
    %16 = arith.addf %14, %15 : vector<4x1xf32>
    %17 = math.rsqrt %16 : vector<4x1xf32>
    %c0_8 = arith.constant 0 : index
    %c0_9 = arith.constant 0 : index
    %18 = vector.load %arg2[%c0_8, %c0_9] : memref<4x1xf32, #tpu.memory_space<vmem>>, vector<4x1xf32>
    %19 = arith.mulf %18, %17 : vector<4x1xf32>
    %c0_10 = arith.constant 0 : index
    %c0_11 = arith.constant 0 : index
    %20 = vector.load %arg3[%c0_10, %c0_11] : memref<4x1xf32, #tpu.memory_space<vmem>>, vector<4x1xf32>
    %21 = arith.mulf %5, %19 : vector<4x1xf32>
    %22 = arith.subf %20, %21 : vector<4x1xf32>
    %23 = vector.shape_cast %19 : vector<4x1xf32> to vector<1x4x1xf32>
    %24 = vector.broadcast %23 : vector<1x4x1xf32> to vector<2x4x256xf32>
    %25 = arith.mulf %0, %24 : vector<2x4x256xf32>
    %26 = vector.shape_cast %22 : vector<4x1xf32> to vector<1x4x1xf32>
    %27 = vector.broadcast %26 : vector<1x4x1xf32> to vector<2x4x256xf32>
    %28 = arith.addf %25, %27 : vector<2x4x256xf32>
    %c0_12 = arith.constant 0 : index
    %c0_13 = arith.constant 0 : index
    %c0_14 = arith.constant 0 : index
    %29 = vector.load %arg4[%c0_12, %c0_13, %c0_14] : memref<2x4x256xf32, #tpu.memory_space<vmem>>, vector<2x4x256xf32>
    tpu.vector_store %arg4[%c0_12, %c0_13, %c0_14], %28 {strides = array<i32>} : memref<2x4x256xf32, #tpu.memory_space<vmem>>, vector<2x4x256xf32>,
    %c0_15 = arith.constant 0 : index
    %c0_16 = arith.constant 0 : index
    %30 = vector.load %arg5[%c0_15, %c0_16] : memref<4x1xf32, #tpu.memory_space<vmem>>, vector<4x1xf32>
    tpu.vector_store %arg5[%c0_15, %c0_16], %5 {strides = array<i32>} : memref<4x1xf32, #tpu.memory_space<vmem>>, vector<4x1xf32>,
    %c0_17 = arith.constant 0 : index
    %c0_18 = arith.constant 0 : index
    %31 = vector.load %arg6[%c0_17, %c0_18] : memref<4x1xf32, #tpu.memory_space<vmem>>, vector<4x1xf32>
    tpu.vector_store %arg6[%c0_17, %c0_18], %14 {strides = array<i32>} : memref<4x1xf32, #tpu.memory_space<vmem>>, vector<4x1xf32>,
    return
  }
  func.func @transform_0(%arg0: i32) -> (i32, i32, i32) {
    %c0_i32 = arith.constant 0 : i32
    %c0_i32_0 = arith.constant 0 : i32
    %c0_i32_1 = arith.constant 0 : i32
    %c0_i32_2 = arith.constant 0 : i32
    return %c0_i32, %c0_i32_0, %c0_i32_1 : i32, i32, i32
  }
  func.func @transform_1(%arg0: i32) -> (i32, i32) {
    %c0_i32 = arith.constant 0 : i32
    %c0_i32_0 = arith.constant 0 : i32
    %c0_i32_1 = arith.constant 0 : i32
    return %c0_i32, %c0_i32_0 : i32, i32
  }
  func.func @transform_2(%arg0: i32) -> (i32, i32) {
    %c0_i32 = arith.constant 0 : i32
    %c0_i32_0 = arith.constant 0 : i32
    %c0_i32_1 = arith.constant 0 : i32
    return %c0_i32, %c0_i32_0 : i32, i32
  }
  func.func @transform_3(%arg0: i32) -> (i32, i32, i32) {
    %c0_i32 = arith.constant 0 : i32
    %c0_i32_0 = arith.constant 0 : i32
    %c0_i32_1 = arith.constant 0 : i32
    %c0_i32_2 = arith.constant 0 : i32
    return %c0_i32, %c0_i32_0, %c0_i32_1 : i32, i32, i32
  }
  func.func @transform_4(%arg0: i32) -> (i32, i32) {
    %c0_i32 = arith.constant 0 : i32
    %c0_i32_0 = arith.constant 0 : i32
    %c0_i32_1 = arith.constant 0 : i32
    return %c0_i32, %c0_i32_0 : i32, i32
  }
  func.func @transform_5(%arg0: i32) -> (i32, i32) {
    %c0_i32 = arith.constant 0 : i32
    %c0_i32_0 = arith.constant 0 : i32
    %c0_i32_1 = arith.constant 0 : i32
    return %c0_i32, %c0_i32_0 : i32, i32
  }
}

</mosaic_0001>

<llo_original>
// kernel: tpu_custom_call.1
$region0: #{tpu_custom_call.1}
  #allocation0 [shape = 'u32[]', space=smem, size = 0x4, offset = 0x4, fixed_abs, tag = 'smem constant byte address 0x4 - core index']
  #allocation1 [shape = 'u32[144,128]{1,0:T(1,128)}', space=vmem, size = 0x12000, scoped, tag = 'internal scratch']
  %s0 = inlined_call_operand.hbm [shape: f32[2,4,256], index: 0, kind: input, shape index: {}]
  %s1 = inlined_call_operand.vmem [shape: f32[4,1], index: 1, kind: input, shape index: {}]
  %s2 = inlined_call_operand.vmem [shape: f32[4,1], index: 2, kind: input, shape index: {}]
  %s3 = inlined_call_operand.hbm [shape: f32[2,4,256], index: 3, kind: output, shape index: {0}]
  %s4 = inlined_call_operand.vmem [shape: f32[4,1], index: 4, kind: output, shape index: {1}]
  %s5 = inlined_call_operand.vmem [shape: f32[4,1], index: 5, kind: output, shape index: {2}]
  %6 = xla_tuple %s3, %s4, %s5
  %s7 = sld [smem:[#allocation0]]
  $region42: #{tpu_custom_call.1} parent=0
    _
  %s9 = ssub.s32 1, %s7
  %s10 = scalar_select 0, %s9, %s7
  $region1: #{tpu_custom_call.1} parent=0
    #allocation2 [shape = 'u8[8192]{0}', space=vmem, size = 0x2000, scoped, tag = 'input window, operand 0, single buffered']
    #allocation3 [shape = 's32[1]{0}', space=sflag, size = 0x4, scoped, tag = 'scoped memory for tpu_custom_call.1']
    #allocation4 [shape = 's32[1]{0}', space=sflag, size = 0x4, scoped, tag = 'scoped memory for tpu_custom_call.1']
    #allocation5 [shape = 'u8[8192]{0}', space=vmem, size = 0x2000, scoped, tag = 'output window, operand 0, single buffered']
    %11 = vsyncpa [#allocation3], 0
    %12 = vsyncpa [#allocation4], 0
    // Predicated region
    $region2: #{tpu_custom_call.1} parent=1 // pred_check
      _
    $region3: #{tpu_custom_call.1} parent=1 // pred_check_branch
      %14 = sbr.rel (0) target = $region5
    $region4: #{tpu_custom_call.1} parent=1 // pred_region
      %s16 = ssub.s32 256, 256
      %17 = vsyncadd [#allocation3], %s16
      %s18 = sshll.u32 [#allocation2], 4
      %s19 = int_to_ptr.vmem [resolvable:$true] %s18
      %24 = dma.hbm_to_vmem [thread:$0]  %s0, 256, %s19, [#allocation3], 128, 128, 8
    $region5: #{tpu_custom_call.1} parent=1 // pred_fallthru
      _
    // Predicated region
    $region6: #{tpu_custom_call.1} parent=1 // pred_check
      _
    $region7: #{tpu_custom_call.1} parent=1 // pred_check_branch
      %26 = sbr.rel (0) target = $region9
    $region8: #{tpu_custom_call.1} parent=1 // pred_region
      _
    $region9: #{tpu_custom_call.1} parent=1 // pred_fallthru
      _
    // Predicated region
    $region10: #{tpu_custom_call.1} parent=1 // pred_check
      _
    $region11: #{tpu_custom_call.1} parent=1 // pred_check_branch
      %28 = sbr.rel (0) target = $region13
    $region12: #{tpu_custom_call.1} parent=1 // pred_region
      _
    $region13: #{tpu_custom_call.1} parent=1 // pred_fallthru
      _
    // Predicated region
    $region14: #{tpu_custom_call.1} parent=1 // pred_check
      _
    $region15: #{tpu_custom_call.1} parent=1 // pred_check_branch
      %30 = sbr.rel (0) target = $region17
    $region16: #{tpu_custom_call.1} parent=1 // pred_region
      %31 = dma.done [#allocation3], 256
    $region17: #{tpu_custom_call.1} parent=1 // pred_fallthru
      _
    %v32 = vld [vmem:[#allocation2] sm:$0xff]
    %v33 = vld [vmem:[#allocation2 + $0x8] sm:$0xff]
    %v36 = vcombine.high %v32, %v32
    %v37 = vcombine.high %v33, %v33
    %vm40 = vcmask 1043456
    %v41 = vsel %vm40, %v32, 0.0
    %v42 = vsel %vm40, %v33, 0.0
    %v43 = vadd.f32 %v41, %v42
    %v44 = vsel %vm40, %v36, 0.0
    %v45 = vsel %vm40, %v37, 0.0
    %v46 = vadd.f32 %v44, %v45
    %v47 = vsel %vm40, %v43, 0.0
    %v48 = vsel %vm40, %v46, 0.0
    %v49 = vadd.f32 %v47, %v48
    %50 = vadd.xlane.f32.xlu0 %v49
    %v51 = vpop.xlane.xlu0 %50
    %v52 = vmul.f32 %v51, 0.001953125
    %v55 = vunpack.c.l.s4 839922192
    %v56 = vunpack.c.0.s8 %v55
    %v57 = vlaneseq
    %v58 = vshrl.u32 %v57, 7
    %v59 = vsub.s32 %v56, %v58
    %v60 = vrot.slane %v52, %v59
    %v62 = vsub.f32 %v32, %v60
    %v63 = vsub.f32 %v33, %v60
    %v64 = vmul.f32 %v62, %v62
    %v65 = vmul.f32 %v63, %v63
    %v68 = vcombine.high %v64, %v64
    %v69 = vcombine.high %v65, %v65
    %v72 = vsel %vm40, %v64, 0.0
    %v73 = vsel %vm40, %v65, 0.0
    %v74 = vadd.f32 %v72, %v73
    %v75 = vsel %vm40, %v68, 0.0
    %v76 = vsel %vm40, %v69, 0.0
    %v77 = vadd.f32 %v75, %v76
    %v78 = vsel %vm40, %v74, 0.0
    %v79 = vsel %vm40, %v77, 0.0
    %v80 = vadd.f32 %v78, %v79
    %81 = vadd.xlane.f32.xlu0 %v80
    %v82 = vpop.xlane.xlu0 %81
    %v83 = vmul.f32 %v82, 0.001953125
    %v84 = vadd.f32 %v83, 1e-05
    %v85 = vrsqrt.pop %v84
    %v86 = vld [vmem:[%s1] sm:$0xf]
    %v87 = vmul.f32 %v86, %v85
    %v88 = vld [vmem:[%s2] sm:$0xf]
    %v89 = vmul.f32 %v52, %v87
    %v90 = vsub.f32 %v88, %v89
    %92 = vset.pattern.permute.xlu0 0
    %93 = vperm.xlu0 %92, %v87
    %v94 = vpop.permute.xlu0 %93
    %v96 = vunpack.c.l.s4 839922192
    %v97 = vunpack.c.0.s8 %v96
    %v98 = vlaneseq
    %v99 = vshrl.u32 %v98, 7
    %v100 = vsub.s32 %v97, %v99
    %v101 = vrot.slane %v94, %v100
    %v103 = vmul.f32 %v32, %v101
    %v104 = vmul.f32 %v33, %v101
    %106 = vset.pattern.permute.xlu0 0
    %107 = vperm.xlu0 %106, %v90
    %v108 = vpop.permute.xlu0 %107
    %v110 = vunpack.c.l.s4 839922192
    %v111 = vunpack.c.0.s8 %v110
    %v112 = vlaneseq
    %v113 = vshrl.u32 %v112, 7
    %v114 = vsub.s32 %v111, %v113
    %v115 = vrot.slane %v108, %v114
    %v117 = vadd.f32 %v103, %v115
    %v118 = vadd.f32 %v104, %v115
    %119 = vst [vmem:[#allocation5] sm:$0xff] %v117
    %120 = vst [vmem:[#allocation5 + $0x8] sm:$0xff] %v118
    %vm121 = vcmask 3072
    %122 = vst.msk [vmem:[%s4] sm:$0xf] %vm121, %v52
    %123 = vst.msk [vmem:[%s5] sm:$0xf] %vm121, %v83
    // Predicated region
    $region18: #{tpu_custom_call.1} parent=1 // pred_check
      _
    $region19: #{tpu_custom_call.1} parent=1 // pred_check_branch
      %125 = sbr.rel (0) target = $region21
    $region20: #{tpu_custom_call.1} parent=1 // pred_region
      %s127 = ssub.s32 256, 256
      %128 = vsyncadd [#allocation4], %s127
      %s129 = sshll.u32 [#allocation5], 4
      %s130 = int_to_ptr.vmem [resolvable:$true] %s129
      %135 = dma.vmem_to_hbm [thread:$0]  %s130, 256, %s3, [#allocation4], 128, 128, 8
    $region21: #{tpu_custom_call.1} parent=1 // pred_fallthru
      _
    // Predicated region
    $region22: #{tpu_custom_call.1} parent=1 // pred_check
      _
    $region23: #{tpu_custom_call.1} parent=1 // pred_check_branch
      %137 = sbr.rel (0) target = $region25
    $region24: #{tpu_custom_call.1} parent=1 // pred_region
      _
    $region25: #{tpu_custom_call.1} parent=1 // pred_fallthru
      _
    // Predicated region
    $region26: #{tpu_custom_call.1} parent=1 // pred_check
      _
    $region27: #{tpu_custom_call.1} parent=1 // pred_check_branch
      %139 = sbr.rel (0) target = $region29
    $region28: #{tpu_custom_call.1} parent=1 // pred_region
      _
    $region29: #{tpu_custom_call.1} parent=1 // pred_fallthru
      _
    // Predicated region
    $region30: #{tpu_custom_call.1} parent=1 // pred_check
      _
    $region31: #{tpu_custom_call.1} parent=1 // pred_check_branch
      %141 = sbr.rel (0) target = $region33
    $region32: #{tpu_custom_call.1} parent=1 // pred_region
      %142 = dma.done [#allocation4], 256
    $region33: #{tpu_custom_call.1} parent=1 // pred_fallthru
      _
    // Predicated region
    $region34: #{tpu_custom_call.1} parent=1 // pred_check
      _
    $region35: #{tpu_custom_call.1} parent=1 // pred_check_branch
      %144 = sbr.rel (0) target = $region37
    $region36: #{tpu_custom_call.1} parent=1 // pred_region
      _
    $region37: #{tpu_custom_call.1} parent=1 // pred_fallthru
      _
    // Predicated region
    $region38: #{tpu_custom_call.1} parent=1 // pred_check
      _
    $region39: #{tpu_custom_call.1} parent=1 // pred_check_branch
      %146 = sbr.rel (0) target = $region41
    $region40: #{tpu_custom_call.1} parent=1 // pred_region
      _
    $region41: #{tpu_custom_call.1} parent=1 // pred_fallthru
      _
    %147 = vsyncpa [#allocation3], 1
    %148 = vsyncpa [#allocation4], 1

</llo_original>
